<compile_context>
chip_gen: v7x
topology: tpu7x:2x2x1
jax: 0.10.0
libtpu: 0.0.40
codegen_flags: <defaults>
</compile_context>

<pallas_src>
import functools
import math

import jax
import jax.numpy as jnp
from jax.experimental import pallas as pl
from jax.experimental.pallas import tpu as pltpu

_LANE = 128


def _round_up(x: int, m: int) -> int:
    return ((x + m - 1) // m) * m


def _glu_kernel(x_ref, w_ref, b_ref, o_ref, *, d_pad, out_dim, mm_dtype):
    # x_ref : (TM, D_in)        streamed in x's original dtype
    # w_ref : (D_in, 2*Dp)      fused [value | gate] weight, pre-transposed
    # b_ref : (1, 2*Dp)         fused bias, float32
    # o_ref : (TM, D_out)       exact output width (masked vst iff D_out % 128)
    x = x_ref[...]
    if x.dtype != jnp.dtype(mm_dtype):
        x = x.astype(mm_dtype)          # in-kernel cast: MXU rate without extra HBM pass
    # One fused MXU matmul with f32 accumulation.
    y = jnp.dot(x, w_ref[...], preferred_element_type=jnp.float32)
    y = y + b_ref[...]
    # Lane-aligned static split (Dp is a multiple of 128) -> free.
    a = y[:, :d_pad]
    g = y[:, d_pad:]
    res = a * jax.nn.sigmoid(g)         # elementwise tail stays f32 (v5e-friendly)
    if out_dim != d_pad:
        res = res[:, :out_dim]
    o_ref[...] = res.astype(o_ref.dtype)


def _vmem_limit_bytes():
    """Per-generation VMEM limit (75% of physical, capped at 100 MiB)."""
    cap = None
    try:
        info = pltpu.get_tpu_info()
        cap = getattr(info, "vmem_capacity_bytes", None)
    except Exception:
        cap = None
    if not cap:
        cap = 64 * 1024 * 1024          # conservative fallback (v7x per-TC VMEM)
    return int(min(int(cap) * 3 // 4, 100 * 1024 * 1024))


def _choose_row_tile(n_rows, per_row_bytes, stream_budget_bytes):
    tm = stream_budget_bytes // max(per_row_bytes, 1)
    tm = max(8, min(tm, 1024))          # diminishing returns past ~1024 rows
    tm -= tm % 8                        # sublane-aligned
    if tm >= n_rows:
        if n_rows > 16:
            # Keep >= 2 grid steps so the "parallel" row axis can be sharded
            # across v7x's two TensorCores (neutral on 1-TC v5e/v6e).
            tm = min(tm, _round_up(pl.cdiv(n_rows, 2), 8))
        else:
            tm = n_rows                 # single full-extent block
    return tm


def gated_linear_unit(x, weight, bias, *, compute_dtype=None, row_tile=None):
    """Forward pass of the TFT GatedLinearUnit.

    x      : (..., input_dim)
    weight : (2*output_dim, input_dim)   -- PyTorch nn.Linear layout
    bias   : (2*output_dim,)
    compute_dtype : optional MXU dtype (e.g. jnp.bfloat16); x is still streamed
                    in its own dtype and cast in-kernel.
    Returns: (..., output_dim), dtype of x.
    """
    in_dim = x.shape[-1]
    two_out = weight.shape[0]
    out_dim = two_out // 2

    lead_shape = x.shape[:-1]
    n_rows = math.prod(lead_shape) if lead_shape else 1

    out_dtype = x.dtype
    mm_dtype = jnp.dtype(compute_dtype) if compute_dtype is not None else jnp.dtype(x.dtype)

    # No dtype cast here: stream x as-is (avoids an extra HBM pass).
    x2d = x.reshape(n_rows, in_dim)

    # Pad the value/gate halves to Dp = round_up(D_out, 128) so the in-kernel
    # split is lane-aligned, fuse them, and pre-transpose to (D_in, 2*Dp) so
    # the kernel feeds the MXU in canonical [M,K]x[K,N] form (one-time XLA op).
    d_pad = _round_up(out_dim, _LANE)
    pad = d_pad - out_dim

    w_a = weight[:out_dim, :]
    w_g = weight[out_dim:, :]
    b_a = bias[:out_dim]
    b_g = bias[out_dim:]
    if pad:
        w_a = jnp.pad(w_a, ((0, pad), (0, 0)))
        w_g = jnp.pad(w_g, ((0, pad), (0, 0)))
        b_a = jnp.pad(b_a, (0, pad))
        b_g = jnp.pad(b_g, (0, pad))
    w_fused = jnp.concatenate([w_a, w_g], axis=0).T.astype(mm_dtype)      # (D_in, 2*Dp)
    b_fused = jnp.concatenate([b_a, b_g]).astype(jnp.float32).reshape(1, 2 * d_pad)

    # --- VMEM / tile budgeting -------------------------------------------
    x_item = jnp.dtype(x.dtype).itemsize
    out_item = jnp.dtype(out_dtype).itemsize
    mm_item = jnp.dtype(mm_dtype).itemsize

    vmem_limit = _vmem_limit_bytes()
    # Constant-index specs are still double-buffered by the pipeline.
    resident = 2 * (in_dim * 2 * d_pad * mm_item) + 2 * (2 * d_pad * 4)
    headroom = 2 * 1024 * 1024
    stream_budget = max(vmem_limit - resident - headroom, 2 * 1024 * 1024)
    # Double-buffered streamed x + out blocks, plus in-kernel f32 temporaries
    # (y and the gated product) per row.
    per_row = 2 * (in_dim * x_item + out_dim * out_item) + 3 * d_pad * 4

    if row_tile is None:
        tm = _choose_row_tile(n_rows, per_row, stream_budget)
    else:
        tm = min(row_tile, n_rows)
        if tm < n_rows:
            tm = max(8, tm - (tm % 8))   # keep (8, 128) rule on partial blocks

    grid = (pl.cdiv(n_rows, tm),)

    kernel = functools.partial(
        _glu_kernel, d_pad=d_pad, out_dim=out_dim, mm_dtype=mm_dtype)

    out2d = pl.pallas_call(
        kernel,
        out_shape=jax.ShapeDtypeStruct((n_rows, out_dim), out_dtype),
        grid=grid,
        in_specs=[
            pl.BlockSpec((tm, in_dim), lambda i: (i, 0)),        # x rows (pipelined)
            pl.BlockSpec((in_dim, 2 * d_pad), lambda i: (0, 0)), # fused weight (resident)
            pl.BlockSpec((1, 2 * d_pad), lambda i: (0, 0)),      # fused bias (f32)
        ],
        out_specs=pl.BlockSpec((tm, out_dim), lambda i: (i, 0)), # exact-width store
        compiler_params=pltpu.CompilerParams(
            dimension_semantics=("parallel",),   # shard rows across v7x's 2 TCs
            vmem_limit_bytes=vmem_limit,
        ),
    )(x2d, w_fused, b_fused)

    return out2d.reshape(*lead_shape, out_dim)


def _reference(x, weight, bias, out_dim):
    y = x @ weight.T + bias
    return y[..., :out_dim] * jax.nn.sigmoid(y[..., out_dim:])


if __name__ == "__main__":
    key = jax.random.PRNGKey(0)

    # --- Case 1: out_dim == in_dim = 32 (default TFT GLU), small shapes ----
    batch, seq, input_dim, output_dim = 2, 8, 32, 32
    kx, kw, kb, key = jax.random.split(key, 4)
    x = jax.random.normal(kx, (batch, seq, input_dim), dtype=jnp.float32)
    bound = 1.0 / (input_dim ** 0.5)
    weight = jax.random.uniform(
        kw, (2 * output_dim, input_dim), minval=-bound, maxval=bound, dtype=jnp.float32)
    bias = jax.random.uniform(
        kb, (2 * output_dim,), minval=-bound, maxval=bound, dtype=jnp.float32)

    ref = _reference(x, weight, bias, output_dim)
    out = jax.block_until_ready(gated_linear_unit(x, weight, bias))
    assert out.shape == (batch, seq, output_dim)
    assert jnp.allclose(out, ref, atol=1e-5, rtol=1e-5)

    # bf16 MXU path (x still streamed as f32, cast in-kernel).
    out_bf16 = jax.block_until_ready(
        gated_linear_unit(x, weight, bias, compute_dtype=jnp.bfloat16))
    assert jnp.allclose(out_bf16, ref, atol=5e-2, rtol=5e-2)

    # --- Case 2: non-128-multiple out_dim + partial trailing row block -----
    batch2, seq2, in2, out2 = 3, 7, 32, 24           # n_rows = 21 -> 2 grid steps
    kx2, kw2, kb2, key = jax.random.split(key, 4)
    x2 = jax.random.normal(kx2, (batch2, seq2, in2), dtype=jnp.float32)
    bound2 = 1.0 / (in2 ** 0.5)
    w2 = jax.random.uniform(
        kw2, (2 * out2, in2), minval=-bound2, maxval=bound2, dtype=jnp.float32)
    b2 = jax.random.uniform(
        kb2, (2 * out2,), minval=-bound2, maxval=bound2, dtype=jnp.float32)

    ref2 = _reference(x2, w2, b2, out2)
    o2 = jax.block_until_ready(gated_linear_unit(x2, w2, b2))
    assert o2.shape == (batch2, seq2, out2)
    assert jnp.allclose(o2, ref2, atol=1e-5, rtol=1e-5)

    print("KERNEL_OK")
</pallas_src>

<mosaic_0001>
module attributes {stable_mosaic.version = 11 : i64} {
  func.func @_glu_kernel(%arg0: i32, %arg1: memref<16x32xf32, #tpu.memory_space<vmem>>, %arg2: memref<32x256xf32, #tpu.memory_space<vmem>>, %arg3: memref<1x256xf32, #tpu.memory_space<vmem>>, %arg4: memref<16x32xf32, #tpu.memory_space<vmem>>) attributes {dimension_semantics = [#tpu.dimension_semantics<parallel>], iteration_bounds = array<i64: 1>, scalar_prefetch = 0 : i64, scratch_operands = 0 : i64, tpu.core_type = #tpu.core_type<tc>, window_params = [{transform_indices = @transform_0, window_bounds = array<i64: 16, 32>}, {pipeline_mode = #tpu.pipeline_mode<synchronous>, transform_indices = @transform_1, window_bounds = array<i64: 32, 256>}, {pipeline_mode = #tpu.pipeline_mode<synchronous>, transform_indices = @transform_2, window_bounds = array<i64: 1, 256>}, {transform_indices = @transform_3, window_bounds = array<i64: 16, 32>}]} {
    %c0 = arith.constant 0 : index
    %c0_0 = arith.constant 0 : index
    %0 = vector.load %arg1[%c0, %c0_0] : memref<16x32xf32, #tpu.memory_space<vmem>>, vector<16x32xf32>
    %c0_1 = arith.constant 0 : index
    %c0_2 = arith.constant 0 : index
    %1 = vector.load %arg2[%c0_1, %c0_2] : memref<32x256xf32, #tpu.memory_space<vmem>>, vector<32x256xf32>
    %cst = arith.constant dense<0.000000e+00> : vector<16x256xf32>
    %2 = tpu.matmul %0, %1, %cst {dimension_numbers = #tpu.dot_dimension_numbers<[1], [0], [0], [1], [0, 0, 1, 1], [], []>} : vector<16x32xf32>, vector<32x256xf32>, vector<16x256xf32> -> vector<16x256xf32>
    %c0_3 = arith.constant 0 : index
    %c0_4 = arith.constant 0 : index
    %3 = vector.load %arg3[%c0_3, %c0_4] : memref<1x256xf32, #tpu.memory_space<vmem>>, vector<1x256xf32>
    %4 = vector.broadcast %3 : vector<1x256xf32> to vector<16x256xf32>
    %5 = arith.addf %2, %4 : vector<16x256xf32>
    %6 = vector.extract_strided_slice %5 {offsets = [0, 0], sizes = [16, 128], strides = [1, 1]} : vector<16x256xf32> to vector<16x128xf32>
    %7 = vector.extract_strided_slice %5 {offsets = [0, 128], sizes = [16, 128], strides = [1, 1]} : vector<16x256xf32> to vector<16x128xf32>
    %8 = arith.negf %7 : vector<16x128xf32>
    %9 = math.exp %8 : vector<16x128xf32>
    %cst_5 = arith.constant 1.000000e+00 : f32
    %10 = vector.broadcast %cst_5 : f32 to vector<16x128xf32>
    %11 = arith.addf %10, %9 : vector<16x128xf32>
    %12 = arith.divf %10, %11 : vector<16x128xf32>
    %13 = arith.mulf %6, %12 : vector<16x128xf32>
    %14 = vector.extract_strided_slice %13 {offsets = [0, 0], sizes = [16, 32], strides = [1, 1]} : vector<16x128xf32> to vector<16x32xf32>
    %c0_6 = arith.constant 0 : index
    %c0_7 = arith.constant 0 : index
    %15 = vector.load %arg4[%c0_6, %c0_7] : memref<16x32xf32, #tpu.memory_space<vmem>>, vector<16x32xf32>
    tpu.vector_store %arg4[%c0_6, %c0_7], %14 {strides = array<i32>} : memref<16x32xf32, #tpu.memory_space<vmem>>, vector<16x32xf32>,
    return
  }
  func.func @transform_0(%arg0: i32) -> (i32, i32) {
    %c0_i32 = arith.constant 0 : i32
    %c0_i32_0 = arith.constant 0 : i32
    return %arg0, %c0_i32 : i32, i32
  }
  func.func @transform_1(%arg0: i32) -> (i32, i32) {
    %c0_i32 = arith.constant 0 : i32
    %c0_i32_0 = arith.constant 0 : i32
    %c0_i32_1 = arith.constant 0 : i32
    return %c0_i32, %c0_i32_0 : i32, i32
  }
  func.func @transform_2(%arg0: i32) -> (i32, i32) {
    %c0_i32 = arith.constant 0 : i32
    %c0_i32_0 = arith.constant 0 : i32
    %c0_i32_1 = arith.constant 0 : i32
    return %c0_i32, %c0_i32_0 : i32, i32
  }
  func.func @transform_3(%arg0: i32) -> (i32, i32) {
    %c0_i32 = arith.constant 0 : i32
    %c0_i32_0 = arith.constant 0 : i32
    return %arg0, %c0_i32 : i32, i32
  }
}

</mosaic_0001>

<llo_original>
// kernel: tpu_custom_call.1
$region0: #{tpu_custom_call.1}
  #allocation0 [shape = 'u32[]', space=smem, size = 0x4, offset = 0x4, fixed_abs, tag = 'smem constant byte address 0x4 - core index']
  #allocation1 [shape = 'u32[144,128]{1,0:T(1,128)}', space=vmem, size = 0x12000, scoped, tag = 'internal scratch']
  %s0 = inlined_call_operand.hbm [shape: f32[16,32], index: 0, kind: input, shape index: {}]
  %s1 = inlined_call_operand.hbm [shape: f32[32,256], index: 1, kind: input, shape index: {}]
  %s2 = inlined_call_operand.vmem [shape: f32[1,256], index: 2, kind: input, shape index: {}]
  %s3 = inlined_call_operand.hbm [shape: f32[16,32], index: 3, kind: output, shape index: {}]
  %s4 = sld [smem:[#allocation0]]
  $region30: #{tpu_custom_call.1} parent=0
    _
  %s6 = ssub.s32 1, %s4
  %s7 = scalar_select 0, %s6, %s4
  $region1: #{tpu_custom_call.1} parent=0
    #allocation2 [shape = 'u8[8192]{0}', space=vmem, size = 0x2000, scoped, tag = 'input window, operand 0, single buffered']
    #allocation3 [shape = 's32[1]{0}', space=sflag, size = 0x4, scoped, tag = 'scoped memory for tpu_custom_call.1']
    #allocation4 [shape = 's32[1]{0}', space=sflag, size = 0x4, scoped, tag = 'scoped memory for tpu_custom_call.1']
    #allocation5 [shape = 'u8[32768]{0}', space=vmem, size = 0x8000, scoped, tag = 'input window, operand 1, single buffered']
    #allocation6 [shape = 's32[1]{0}', space=sflag, size = 0x4, scoped, tag = 'scoped memory for tpu_custom_call.1']
    #allocation7 [shape = 'u8[8192]{0}', space=vmem, size = 0x2000, scoped, tag = 'output window, operand 0, single buffered']
    %8 = vsyncpa [#allocation3], 0
    %9 = vsyncpa [#allocation6], 0
    %10 = vsyncpa [#allocation4], 0
    // Predicated region
    $region2: #{tpu_custom_call.1} parent=1 // pred_check
      _
    $region3: #{tpu_custom_call.1} parent=1 // pred_check_branch
      %12 = sbr.rel (0) target = $region5
    $region4: #{tpu_custom_call.1} parent=1 // pred_region
      %s14 = ssub.s32 256, 256
      %15 = vsyncadd [#allocation3], %s14
      %s16 = sshll.u32 [#allocation2], 4
      %s17 = int_to_ptr.vmem [resolvable:$true] %s16
      %22 = dma.hbm_to_vmem [thread:$0]  %s0, 256, %s17, [#allocation3], 128, 128, 8
    $region5: #{tpu_custom_call.1} parent=1 // pred_fallthru
      _
    // Predicated region
    $region6: #{tpu_custom_call.1} parent=1 // pred_check
      _
    $region7: #{tpu_custom_call.1} parent=1 // pred_check_branch
      %24 = sbr.rel (0) target = $region9
    $region8: #{tpu_custom_call.1} parent=1 // pred_region
      %s26 = ssub.s32 1024, 1024
      %27 = vsyncadd [#allocation6], %s26
      %s28 = sshll.u32 [#allocation5], 4
      %s29 = int_to_ptr.vmem [resolvable:$true] %s28
      %34 = dma.hbm_to_vmem [thread:$0]  %s1, 1024, %s29, [#allocation6], 256, 256, 16
    $region9: #{tpu_custom_call.1} parent=1 // pred_fallthru
      _
    // Predicated region
    $region10: #{tpu_custom_call.1} parent=1 // pred_check
      _
    $region11: #{tpu_custom_call.1} parent=1 // pred_check_branch
      %36 = sbr.rel (0) target = $region13
    $region12: #{tpu_custom_call.1} parent=1 // pred_region
      _
    $region13: #{tpu_custom_call.1} parent=1 // pred_fallthru
      _
    // Predicated region
    $region14: #{tpu_custom_call.1} parent=1 // pred_check
      _
    $region15: #{tpu_custom_call.1} parent=1 // pred_check_branch
      %38 = sbr.rel (0) target = $region17
    $region16: #{tpu_custom_call.1} parent=1 // pred_region
      %39 = dma.done [#allocation3], 256
    $region17: #{tpu_custom_call.1} parent=1 // pred_fallthru
      _
    // Predicated region
    $region18: #{tpu_custom_call.1} parent=1 // pred_check
      _
    $region19: #{tpu_custom_call.1} parent=1 // pred_check_branch
      %41 = sbr.rel (0) target = $region21
    $region20: #{tpu_custom_call.1} parent=1 // pred_region
      %42 = dma.done [#allocation6], 1024
    $region21: #{tpu_custom_call.1} parent=1 // pred_fallthru
      _
    %v43 = vld [vmem:[#allocation2] sm:$0xff]
    %v44 = vld [vmem:[#allocation2 + $0x8] sm:$0xff]
    %v45 = vld [vmem:[#allocation5] sm:$0xff]
    %v46 = vld [vmem:[#allocation5 + $0x8] sm:$0xff]
    %v47 = vld [vmem:[#allocation5 + $0x10] sm:$0xff]
    %v48 = vld [vmem:[#allocation5 + $0x18] sm:$0xff]
    %v49 = vld [vmem:[#allocation5 + $0x20] sm:$0xff]
    %v50 = vld [vmem:[#allocation5 + $0x28] sm:$0xff]
    %v51 = vld [vmem:[#allocation5 + $0x30] sm:$0xff]
    %v52 = vld [vmem:[#allocation5 + $0x38] sm:$0xff]
    %v53 = vld [vmem:[%s2] sm:$0x3]
    %v55 = vlaneseq
    %v56 = vshrl.u32 %v55, 7
    %v57 = vsub.s32 0, %v56
    %v58 = vrot.slane %v53, %v57
    %v59 = vlaneseq
    %v60 = vshrl.u32 %v59, 7
    %v61 = vsub.s32 1, %v60
    %v62 = vrot.slane %v53, %v61
    %vm65 = vcmask 261120
    %v67 = vsel %vm65, %v43, 0
    %v70 = vsel %vm65, %v44, 0
    %72 = vmatprep.subr.mxu0 %v46
    %73 = vmatpush1.msra.mxu0 %v45
    %74 = vmatprep.subr.mxu0 %v48
    %75 = vmatpush1.msra.mxu0 %v47
    %76 = vmatprep.subr.mxu0 %v50
    %77 = vmatpush1.msra.mxu0 %v49
    %78 = vmatprep.subr.mxu0 %v52
    %79 = vmatpush1.msra.mxu0 %v51
    %80 = vmatprep.subr.mxu0 0.0
    %81 = vmatpush1.msra.mxu0 0.0
    %82 = vmatprep.subr.mxu0 0.0
    %83 = vmatpush1.msra.mxu0 0.0
    %84 = vmatprep.subr.mxu0 0.0
    %85 = vmatpush1.msra.mxu0 0.0
    %86 = vmatprep.subr.mxu0 0.0
    %87 = vmatpush1.msra.mxu0 0.0
    %88 = vmatprep.subr.mxu0 0.0
    %89 = vmatpush1.msra.mxu0 0.0
    %90 = vmatprep.subr.mxu0 0.0
    %91 = vmatpush1.msra.mxu0 0.0
    %92 = vmatprep.subr.mxu0 0.0
    %93 = vmatpush1.msra.mxu0 0.0
    %94 = vmatprep.subr.mxu0 0.0
    %95 = vmatpush1.msra.mxu0 0.0
    %96 = vmatprep.subr.mxu0 0.0
    %97 = vmatpush1.msra.mxu0 0.0
    %98 = vmatprep.subr.mxu0 0.0
    %99 = vmatpush1.msra.mxu0 0.0
    %100 = vmatprep.subr.mxu0 0.0
    %101 = vmatpush1.msra.mxu0 0.0
    %102 = vmatprep.subr.mxu0 0.0
    %103 = vmatpush1.msra.mxu0 0.0
    %104 = vmatprep.subr.mxu0 0.0
    %105 = vmatpush1.msra.mxu0 0.0
    %106 = vmatprep.subr.mxu0 0.0
    %107 = vmatpush1.msra.mxu0 0.0
    %108 = vmatprep.subr.mxu0 0.0
    %109 = vmatpush1.msra.mxu0 0.0
    %110 = vmatprep.subr.mxu0 0.0
    %111 = vmatpush1.msra.mxu0 0.0
    %112 = vmatprep.subr.mxu0 0.0
    %113 = vmatpush1.msra.mxu0 0.0
    %114 = vmatprep.subr.mxu0 0.0
    %115 = vmatpush1.msra.mxu0 0.0
    %116 = vmatprep.subr.mxu0 0.0
    %117 = vmatpush1.msra.mxu0 0.0
    %118 = vmatprep.subr.mxu0 0.0
    %119 = vmatpush1.msra.mxu0 0.0
    %120 = vmatprep.subr.mxu0 0.0
    %121 = vmatpush1.msra.mxu0 0.0
    %122 = vmatprep.subr.mxu0 0.0
    %123 = vmatpush1.msra.mxu0 0.0
    %124 = vmatprep.subr.mxu0 0.0
    %125 = vmatpush1.msra.mxu0 0.0
    %126 = vmatprep.subr.mxu0 0.0
    %127 = vmatpush1.msra.mxu0 0.0
    %128 = vmatprep.subr.mxu0 0.0
    %129 = vmatpush1.msra.mxu0 0.0
    %130 = vmatprep.subr.mxu0 0.0
    %131 = vmatpush1.msra.mxu0 0.0
    %132 = vmatprep.subr.mxu0 0.0
    %133 = vmatpush1.msra.mxu0 0.0
    %134 = vmatprep.subr.mxu0 0.0
    %135 = vmatpush1.msra.mxu0 0.0
    %136 = vmatprep.mubr.f32.mxu0 0.0
    %137 = vmatmul.mubr.f32.gmra.mrb[0].mxu0 %v67
    %v138 = vpop.f32.mrb[0].mxu0
    %v139 = vadd.f32 %v58, %v138
    %v140 = vpop.f32.mrb[0].mxu0
    %v141 = vadd.f32 %v62, %v140
    %142 = vmatprep.mubr.f32.mxu0 0.0
    %143 = vmatmul.mubr.f32.gmra.mrb[0].mxu0 %v70
    %v144 = vpop.f32.mrb[0].mxu0
    %v145 = vadd.f32 %v58, %v144
    %v146 = vpop.f32.mrb[0].mxu0
    %v147 = vadd.f32 %v62, %v146
    %148 = vdwg.mxu0
    %v149 = vxor.u32 %v141, 2147483648
    %v150 = vxor.u32 %v147, 2147483648
    %v151 = vmul.f32 %v149, 1.442695
    %v152 = vpow.pop %v151
    %v153 = vmul.f32 %v150, 1.442695
    %v154 = vpow.pop %v153
    %v155 = vadd.f32 %v152, 1.0
    %v156 = vadd.f32 %v154, 1.0
    %v157 = vrcp.pop %v155
    %v158 = vmul.f32 1.0, %v157
    %v159 = vrcp.pop %v156
    %v160 = vmul.f32 1.0, %v159
    %v161 = vmul.f32 %v139, %v158
    %v162 = vmul.f32 %v145, %v160
    %163 = vst.msk [vmem:[#allocation7] sm:$0xff] %vm65, %v161
    %164 = vst.msk [vmem:[#allocation7 + $0x8] sm:$0xff] %vm65, %v162
    // Predicated region
    $region22: #{tpu_custom_call.1} parent=1 // pred_check
      _
    $region23: #{tpu_custom_call.1} parent=1 // pred_check_branch
      %166 = sbr.rel (0) target = $region25
    $region24: #{tpu_custom_call.1} parent=1 // pred_region
      %s168 = ssub.s32 256, 256
      %169 = vsyncadd [#allocation4], %s168
      %s170 = sshll.u32 [#allocation7], 4
      %s171 = int_to_ptr.vmem [resolvable:$true] %s170
      %176 = dma.vmem_to_hbm [thread:$0]  %s171, 256, %s3, [#allocation4], 128, 128, 8
    $region25: #{tpu_custom_call.1} parent=1 // pred_fallthru
      _
    // Predicated region
    $region26: #{tpu_custom_call.1} parent=1 // pred_check
      _
    $region27: #{tpu_custom_call.1} parent=1 // pred_check_branch
      %178 = sbr.rel (0) target = $region29
    $region28: #{tpu_custom_call.1} parent=1 // pred_region
      %179 = dma.done [#allocation4], 256
    $region29: #{tpu_custom_call.1} parent=1 // pred_fallthru
      _
    %180 = vsyncpa [#allocation3], 1
    %181 = vsyncpa [#allocation6], 1
    %182 = vsyncpa [#allocation4], 1

</llo_original>
